<compile_context>
chip_gen: v5e
topology: v5e:2x2
jax: 0.10.0
libtpu: 0.0.40
codegen_flags: <defaults>
</compile_context>

<pallas_src>
import jax
import jax.numpy as jnp
from jax.experimental import pallas as pl
from jax.experimental.pallas import tpu as pltpu

_LANES = 128        # lane-dense padded hidden width (>= 50)
_OUT_SUB = 8        # output sublane slab (>= 4 real outputs)
_DEFAULT_TB = 2048  # batch tile (lanes); 128-multiple, safe for v5e's 16 MiB scoped VMEM


def _round_up(n, m):
    return ((n + m - 1) // m) * m


# ----------------------------- Pallas kernel --------------------------------
def _mlp_kernel(x_ref, small_ref, w2t_ref, w3t_ref, o_ref):
    # x_ref:     (1, TB)     batch on the lane axis (feature-major layout)
    # small_ref: (128, 8)    f32 columns: [w1, b1, b2, b3, 0, 0, 0, 0]
    # w2t_ref:   (128, 128)  W2^T zero-padded (out x in), f32 or bf16
    # w3t_ref:   (8, 128)    W3^T zero-padded (out x in), f32 or bf16
    # o_ref:     (8, TB)     sublanes 0..3 are the real outputs
    x = x_ref[...]                           # (1, TB)
    w1 = small_ref[:, 0:1]                   # (128, 1)
    b1 = small_ref[:, 1:2]                   # (128, 1)
    b2 = small_ref[:, 2:3]                   # (128, 1)
    b3 = small_ref[0:_OUT_SUB, 3:4]          # (8, 1)

    # fc1 + ReLU: K=1 contraction -> VPU broadcast multiply, no MXU pass.
    h1 = jnp.maximum(w1 * x + b1, 0.0)       # (128, TB), f32

    mxu_dtype = w2t_ref.dtype                # f32 or bf16 (weight-slab dtype)

    # fc2 + ReLU: (128,128) @ (128,TB) MXU matmul, f32 accumulation.
    h2 = jnp.dot(w2t_ref[...], h1.astype(mxu_dtype),
                 preferred_element_type=jnp.float32)
    h2 = jnp.maximum(h2 + b2, 0.0)           # (128, TB), f32

    # fc3 (no activation): (8,128) @ (128,TB).  Zero padding of W/b keeps the
    # padded sublanes of h1/h2/out exactly 0.
    out = jnp.dot(w3t_ref[...], h2.astype(mxu_dtype),
                  preferred_element_type=jnp.float32)
    o_ref[...] = (out + b3).astype(o_ref.dtype)


# ----------------------- host-side parameter packing ------------------------
def _pack_params(params, weights_dtype):
    """Pack the 6 parameter tensors into 3 feature-major, lane-dense slabs."""
    w1, b1 = params["W1"], params["b1"]   # (1, 50), (1, 50)
    w2, b2 = params["W2"], params["b2"]   # (50, 50), (1, 50)
    w3, b3 = params["W3"], params["b3"]   # (50, 4),  (1, 4)

    def col(v, rows):  # (1, n) -> zero-padded (rows, 1) column
        v = v.reshape(-1, 1).astype(jnp.float32)
        return jnp.pad(v, ((0, rows - v.shape[0]), (0, 0)))

    # (128, 8): columns [w1, b1, b2, b3, 0...]; stays f32 (VPU-side math).
    small = jnp.concatenate(
        [col(w1, _LANES), col(b1, _LANES), col(b2, _LANES), col(b3, _LANES),
         jnp.zeros((_LANES, 4), jnp.float32)], axis=1)

    # Transposed weights, zero-padded: padded rows/cols are 0 so padded
    # activation sublanes remain exactly 0 through ReLU and the matmuls.
    w2t = jnp.pad(w2.T, ((0, _LANES - w2.shape[1]), (0, _LANES - w2.shape[0])))
    w3t = jnp.pad(w3.T, ((0, _OUT_SUB - w3.shape[1]), (0, _LANES - w3.shape[0])))
    return small, w2t.astype(weights_dtype), w3t.astype(weights_dtype)


# --------------------------------- wrapper -----------------------------------
def parameter_estimator_forward(x, params, *, weights_dtype=jnp.float32,
                                tb=_DEFAULT_TB):
    """x: (B, 1) float32.  params: dict of W1,b1,W2,b2,W3,b3 stored (in, out).

    weights_dtype=jnp.bfloat16 runs the two MXU matmuls in bf16 (f32 accumulate)
    for ~3x MXU throughput on v5e/v6e/v7x; VPU math stays f32.
    """
    B = x.shape[0]
    # Feature-major: batch goes on the lane axis (single input feature).
    xt = x.reshape(1, B).astype(jnp.float32)

    # Batch tile: 128-multiple, capped at `tb` (<= 2048 keeps v5e's 16 MiB
    # scoped-VMEM default comfortable; per-tile footprint ~0.5 KB/sample, so
    # larger tiles are also safe on v6e/v7x if swept upward).
    tb = _round_up(min(tb, _round_up(B, _LANES)), _LANES)
    b_pad = _round_up(B, tb)
    if b_pad != B:
        xt = jnp.pad(xt, ((0, 0), (0, b_pad - B)))

    small, w2t, w3t = _pack_params(params, weights_dtype)
    grid = (b_pad // tb,)

    wbytes = w2t.dtype.itemsize
    cost = pl.CostEstimate(
        flops=2 * b_pad * _LANES * (_LANES + _OUT_SUB) + 2 * b_pad * _LANES,
        transcendentals=0,
        bytes_accessed=(4 * b_pad                              # x
                        + 4 * small.size
                        + wbytes * (w2t.size + w3t.size)
                        + 4 * _OUT_SUB * b_pad))               # output slab

    out = pl.pallas_call(
        _mlp_kernel,
        out_shape=jax.ShapeDtypeStruct((_OUT_SUB, b_pad), jnp.float32),
        grid=grid,
        in_specs=[
            pl.BlockSpec((1, tb), lambda i: (0, i)),             # x: streamed
            pl.BlockSpec((_LANES, 8), lambda i: (0, 0)),         # params: DMA'd
            pl.BlockSpec((_LANES, _LANES), lambda i: (0, 0)),    # once, VMEM-
            pl.BlockSpec((_OUT_SUB, _LANES), lambda i: (0, 0)),  # resident
        ],
        out_specs=pl.BlockSpec((_OUT_SUB, tb), lambda i: (0, i)),
        compiler_params=pltpu.CompilerParams(
            dimension_semantics=("parallel",)),   # 2 TCs on v7x; no-op v5e/v6e
        cost_estimate=cost,
    )(xt, small, w2t, w3t)

    # TODO(synk): sweep pipeline_mode=pl.Buffered(3) on the x/out BlockSpecs for
    # very large B; at B~8 the kernel is pure launch overhead — batch problems
    # at the call site instead of tuning here.
    return out[:4, :B].T


# ------------------------ deterministic parameter init ----------------------
def init_params(key):
    """PyTorch-style uniform(-1/sqrt(fan_in), +1/sqrt(fan_in)) init, stored
    as (in, out) for the x @ W + b convention."""
    def linear(key, fan_in, fan_out):
        kw, kb = jax.random.split(key)
        bound = 1.0 / jnp.sqrt(jnp.float32(fan_in))
        w = jax.random.uniform(kw, (fan_in, fan_out), jnp.float32, -bound, bound)
        b = jax.random.uniform(kb, (1, fan_out), jnp.float32, -bound, bound)
        return w, b

    k1, k2, k3 = jax.random.split(key, 3)
    W1, b1 = linear(k1, 1, 50)
    W2, b2 = linear(k2, 50, 50)
    W3, b3 = linear(k3, 50, 4)
    return {"W1": W1, "b1": b1, "W2": W2, "b2": b2, "W3": W3, "b3": b3}


# ----------------------------------- main ------------------------------------
if __name__ == "__main__":
    key = jax.random.PRNGKey(0)
    kp, kx = jax.random.split(key)

    params = init_params(kp)

    batch = 8
    x = jax.random.normal(kx, (batch, 1), jnp.float32)

    # pure-JAX reference (high-precision matmuls)
    def ref(xv, p):
        hp = jax.lax.Precision.HIGHEST
        h = jnp.maximum(jnp.dot(xv, p["W1"], precision=hp) + p["b1"], 0.0)
        h = jnp.maximum(jnp.dot(h, p["W2"], precision=hp) + p["b2"], 0.0)
        return jnp.dot(h, p["W3"], precision=hp) + p["b3"]

    expected = ref(x, params)

    # f32 path
    out_f32 = jax.block_until_ready(parameter_estimator_forward(x, params))
    assert out_f32.shape == (batch, 4)
    assert jnp.allclose(out_f32, expected, atol=1e-4, rtol=1e-4)

    # bf16-weight MXU path (looser tolerance: bf16 weights change numerics)
    out_bf16 = jax.block_until_ready(
        parameter_estimator_forward(x, params, weights_dtype=jnp.bfloat16))
    assert out_bf16.shape == (batch, 4)
    assert jnp.allclose(out_bf16, expected, atol=5e-2, rtol=5e-2)

    print("KERNEL_OK")
</pallas_src>

<mosaic_0001>
module attributes {stable_mosaic.version = 11 : i64} {
  func.func @_mlp_kernel(%arg0: i32, %arg1: memref<1x128xf32, #tpu.memory_space<vmem>>, %arg2: memref<128x8xf32, #tpu.memory_space<vmem>>, %arg3: memref<128x128xf32, #tpu.memory_space<vmem>>, %arg4: memref<8x128xf32, #tpu.memory_space<vmem>>, %arg5: memref<8x128xf32, #tpu.memory_space<vmem>>) attributes {dimension_semantics = [#tpu.dimension_semantics<parallel>], iteration_bounds = array<i64: 1>, scalar_prefetch = 0 : i64, scratch_operands = 0 : i64, tpu.core_type = #tpu.core_type<tc>, window_params = [{transform_indices = @transform_0, window_bounds = array<i64: 1, 128>}, {pipeline_mode = #tpu.pipeline_mode<synchronous>, transform_indices = @transform_1, window_bounds = array<i64: 128, 8>}, {pipeline_mode = #tpu.pipeline_mode<synchronous>, transform_indices = @transform_2, window_bounds = array<i64: 128, 128>}, {pipeline_mode = #tpu.pipeline_mode<synchronous>, transform_indices = @transform_3, window_bounds = array<i64: 8, 128>}, {transform_indices = @transform_4, window_bounds = array<i64: 8, 128>}]} {
    %c0 = arith.constant 0 : index
    %c0_0 = arith.constant 0 : index
    %0 = vector.load %arg1[%c0, %c0_0] : memref<1x128xf32, #tpu.memory_space<vmem>>, vector<1x128xf32>
    %c0_1 = arith.constant 0 : index
    %c0_2 = arith.constant 0 : index
    %1 = vector.load %arg2[%c0_1, %c0_2] : memref<128x8xf32, #tpu.memory_space<vmem>>, vector<128x1xf32>
    %c0_3 = arith.constant 0 : index
    %c1 = arith.constant 1 : index
    %2 = vector.load %arg2[%c0_3, %c1] : memref<128x8xf32, #tpu.memory_space<vmem>>, vector<128x1xf32>
    %c0_4 = arith.constant 0 : index
    %c2 = arith.constant 2 : index
    %3 = vector.load %arg2[%c0_4, %c2] : memref<128x8xf32, #tpu.memory_space<vmem>>, vector<128x1xf32>
    %c0_5 = arith.constant 0 : index
    %c3 = arith.constant 3 : index
    %4 = vector.load %arg2[%c0_5, %c3] : memref<128x8xf32, #tpu.memory_space<vmem>>, vector<8x1xf32>
    %5 = vector.broadcast %1 : vector<128x1xf32> to vector<128x128xf32>
    %6 = vector.broadcast %0 : vector<1x128xf32> to vector<128x128xf32>
    %7 = arith.mulf %5, %6 : vector<128x128xf32>
    %8 = vector.broadcast %2 : vector<128x1xf32> to vector<128x128xf32>
    %9 = arith.addf %7, %8 : vector<128x128xf32>
    %cst = arith.constant 0.000000e+00 : f32
    %10 = vector.broadcast %cst : f32 to vector<128x128xf32>
    %11 = arith.maximumf %9, %10 : vector<128x128xf32>
    %c0_6 = arith.constant 0 : index
    %c0_7 = arith.constant 0 : index
    %12 = vector.load %arg3[%c0_6, %c0_7] : memref<128x128xf32, #tpu.memory_space<vmem>>, vector<128x128xf32>
    %cst_8 = arith.constant dense<0.000000e+00> : vector<128x128xf32>
    %13 = tpu.matmul %12, %11, %cst_8 {dimension_numbers = #tpu.dot_dimension_numbers<[1], [0], [0], [1], [0, 0, 1, 1], [], []>} : vector<128x128xf32>, vector<128x128xf32>, vector<128x128xf32> -> vector<128x128xf32>
    %14 = vector.broadcast %3 : vector<128x1xf32> to vector<128x128xf32>
    %15 = arith.addf %13, %14 : vector<128x128xf32>
    %cst_9 = arith.constant 0.000000e+00 : f32
    %16 = vector.broadcast %cst_9 : f32 to vector<128x128xf32>
    %17 = arith.maximumf %15, %16 : vector<128x128xf32>
    %c0_10 = arith.constant 0 : index
    %c0_11 = arith.constant 0 : index
    %18 = vector.load %arg4[%c0_10, %c0_11] : memref<8x128xf32, #tpu.memory_space<vmem>>, vector<8x128xf32>
    %cst_12 = arith.constant dense<0.000000e+00> : vector<8x128xf32>
    %19 = tpu.matmul %18, %17, %cst_12 {dimension_numbers = #tpu.dot_dimension_numbers<[1], [0], [0], [1], [0, 0, 1, 1], [], []>} : vector<8x128xf32>, vector<128x128xf32>, vector<8x128xf32> -> vector<8x128xf32>
    %20 = vector.broadcast %4 : vector<8x1xf32> to vector<8x128xf32>
    %21 = arith.addf %19, %20 : vector<8x128xf32>
    %c0_13 = arith.constant 0 : index
    %c0_14 = arith.constant 0 : index
    %22 = vector.load %arg5[%c0_13, %c0_14] : memref<8x128xf32, #tpu.memory_space<vmem>>, vector<8x128xf32>
    tpu.vector_store %arg5[%c0_13, %c0_14], %21 {strides = array<i32>} : memref<8x128xf32, #tpu.memory_space<vmem>>, vector<8x128xf32>,
    return
  }
  func.func @transform_0(%arg0: i32) -> (i32, i32) {
    %c0_i32 = arith.constant 0 : i32
    %c0_i32_0 = arith.constant 0 : i32
    return %c0_i32, %arg0 : i32, i32
  }
  func.func @transform_1(%arg0: i32) -> (i32, i32) {
    %c0_i32 = arith.constant 0 : i32
    %c0_i32_0 = arith.constant 0 : i32
    %c0_i32_1 = arith.constant 0 : i32
    return %c0_i32, %c0_i32_0 : i32, i32
  }
  func.func @transform_2(%arg0: i32) -> (i32, i32) {
    %c0_i32 = arith.constant 0 : i32
    %c0_i32_0 = arith.constant 0 : i32
    %c0_i32_1 = arith.constant 0 : i32
    return %c0_i32, %c0_i32_0 : i32, i32
  }
  func.func @transform_3(%arg0: i32) -> (i32, i32) {
    %c0_i32 = arith.constant 0 : i32
    %c0_i32_0 = arith.constant 0 : i32
    %c0_i32_1 = arith.constant 0 : i32
    return %c0_i32, %c0_i32_0 : i32, i32
  }
  func.func @transform_4(%arg0: i32) -> (i32, i32) {
    %c0_i32 = arith.constant 0 : i32
    %c0_i32_0 = arith.constant 0 : i32
    return %c0_i32, %arg0 : i32, i32
  }
}

</mosaic_0001>

<llo_original>
// kernel: tpu_custom_call.1
$region0: #{tpu_custom_call.1}
  #allocation0 [shape = 'u32[]', space=smem, size = 0x4, offset = 0x4, fixed_abs, tag = 'smem constant byte address 0x4 - core index']
  #allocation1 [shape = 'u32[72,128]{1,0:T(1,128)}', space=vmem, size = 0x9000, scoped, tag = 'internal scratch']
  %s0 = inlined_call_operand.vmem [shape: f32[1,128], index: 0, kind: input, shape index: {}]
  %s1 = inlined_call_operand.vmem [shape: f32[128,8], index: 1, kind: input, shape index: {}]
  %s2 = inlined_call_operand.vmem [shape: f32[128,128], index: 2, kind: input, shape index: {}]
  %s3 = inlined_call_operand.vmem [shape: f32[8,128], index: 3, kind: input, shape index: {}]
  %s4 = inlined_call_operand.hbm [shape: f32[8,128], index: 4, kind: output, shape index: {}]
  %s5 = sld [smem:[#allocation0]]
  $region26: #{tpu_custom_call.1} parent=0
    _
  %s7 = ssub.s32 1, %s5
  %s8 = scalar_select 0, %s7, %s5
  $region1: #{tpu_custom_call.1} parent=0
    #allocation2 [shape = 'u8[4096]{0}', space=vmem, size = 0x1000, scoped, tag = 'output window, operand 0, single buffered']
    #allocation3 [shape = 's32[1]{0}', space=sflag, size = 0x4, scoped, tag = 'scoped memory for tpu_custom_call.1']
    %9 = vsyncpa [#allocation3], 0
    // Predicated region
    $region2: #{tpu_custom_call.1} parent=1 // pred_check
      _
    $region3: #{tpu_custom_call.1} parent=1 // pred_check_branch
      %11 = sbr.rel (0) target = $region5
    $region4: #{tpu_custom_call.1} parent=1 // pred_region
      _
    $region5: #{tpu_custom_call.1} parent=1 // pred_fallthru
      _
    // Predicated region
    $region6: #{tpu_custom_call.1} parent=1 // pred_check
      _
    $region7: #{tpu_custom_call.1} parent=1 // pred_check_branch
      %13 = sbr.rel (0) target = $region9
    $region8: #{tpu_custom_call.1} parent=1 // pred_region
      _
    $region9: #{tpu_custom_call.1} parent=1 // pred_fallthru
      _
    // Predicated region
    $region10: #{tpu_custom_call.1} parent=1 // pred_check
      _
    $region11: #{tpu_custom_call.1} parent=1 // pred_check_branch
      %15 = sbr.rel (0) target = $region13
    $region12: #{tpu_custom_call.1} parent=1 // pred_region
      _
    $region13: #{tpu_custom_call.1} parent=1 // pred_fallthru
      _
    // Predicated region
    $region14: #{tpu_custom_call.1} parent=1 // pred_check
      _
    $region15: #{tpu_custom_call.1} parent=1 // pred_check_branch
      %17 = sbr.rel (0) target = $region17
    $region16: #{tpu_custom_call.1} parent=1 // pred_region
      _
    $region17: #{tpu_custom_call.1} parent=1 // pred_fallthru
      _
    %v18 = vld [vmem:[%s0] sm:$0x1]
    %v19 = vld [vmem:[%s1] sm:$0xff]
    %v20 = vld [vmem:[%s1 + $0x8] sm:$0xff]
    %v21 = vld [vmem:[%s1 + $0x10] sm:$0xff]
    %v22 = vld [vmem:[%s1 + $0x18] sm:$0xff]
    %v23 = vld [vmem:[%s1 + $0x20] sm:$0xff]
    %v24 = vld [vmem:[%s1 + $0x28] sm:$0xff]
    %v25 = vld [vmem:[%s1 + $0x30] sm:$0xff]
    %v26 = vld [vmem:[%s1 + $0x38] sm:$0xff]
    %v27 = vld [vmem:[%s1 + $0x40] sm:$0xff]
    %v28 = vld [vmem:[%s1 + $0x48] sm:$0xff]
    %v29 = vld [vmem:[%s1 + $0x50] sm:$0xff]
    %v30 = vld [vmem:[%s1 + $0x58] sm:$0xff]
    %v31 = vld [vmem:[%s1 + $0x60] sm:$0xff]
    %v32 = vld [vmem:[%s1 + $0x68] sm:$0xff]
    %v33 = vld [vmem:[%s1 + $0x70] sm:$0xff]
    %v34 = vld [vmem:[%s1 + $0x78] sm:$0xff]
    %36 = vset.pattern.permute.xlu0 0
    %37 = vperm.xlu0 %36, %v19
    %v38 = vpop.permute.xlu0 %37
    %41 = vset.pattern.permute.xlu0 0
    %42 = vperm.xlu0 %41, %v20
    %v43 = vpop.permute.xlu0 %42
    %46 = vset.pattern.permute.xlu0 0
    %47 = vperm.xlu0 %46, %v21
    %v48 = vpop.permute.xlu0 %47
    %51 = vset.pattern.permute.xlu0 0
    %52 = vperm.xlu0 %51, %v22
    %v53 = vpop.permute.xlu0 %52
    %56 = vset.pattern.permute.xlu0 0
    %57 = vperm.xlu0 %56, %v23
    %v58 = vpop.permute.xlu0 %57
    %61 = vset.pattern.permute.xlu0 0
    %62 = vperm.xlu0 %61, %v24
    %v63 = vpop.permute.xlu0 %62
    %66 = vset.pattern.permute.xlu0 0
    %67 = vperm.xlu0 %66, %v25
    %v68 = vpop.permute.xlu0 %67
    %71 = vset.pattern.permute.xlu0 0
    %72 = vperm.xlu0 %71, %v26
    %v73 = vpop.permute.xlu0 %72
    %76 = vset.pattern.permute.xlu0 0
    %77 = vperm.xlu0 %76, %v27
    %v78 = vpop.permute.xlu0 %77
    %81 = vset.pattern.permute.xlu0 0
    %82 = vperm.xlu0 %81, %v28
    %v83 = vpop.permute.xlu0 %82
    %86 = vset.pattern.permute.xlu0 0
    %87 = vperm.xlu0 %86, %v29
    %v88 = vpop.permute.xlu0 %87
    %91 = vset.pattern.permute.xlu0 0
    %92 = vperm.xlu0 %91, %v30
    %v93 = vpop.permute.xlu0 %92
    %96 = vset.pattern.permute.xlu0 0
    %97 = vperm.xlu0 %96, %v31
    %v98 = vpop.permute.xlu0 %97
    %101 = vset.pattern.permute.xlu0 0
    %102 = vperm.xlu0 %101, %v32
    %v103 = vpop.permute.xlu0 %102
    %106 = vset.pattern.permute.xlu0 0
    %107 = vperm.xlu0 %106, %v33
    %v108 = vpop.permute.xlu0 %107
    %111 = vset.pattern.permute.xlu0 0
    %112 = vperm.xlu0 %111, %v34
    %v113 = vpop.permute.xlu0 %112
    %v116 = vperm.slane %v18, 0
    %v118 = vmul.f32 %v38, %v116
    %v119 = vmul.f32 %v43, %v116
    %v120 = vmul.f32 %v48, %v116
    %v121 = vmul.f32 %v53, %v116
    %v122 = vmul.f32 %v58, %v116
    %v123 = vmul.f32 %v63, %v116
    %v124 = vmul.f32 %v68, %v116
    %v125 = vmul.f32 %v73, %v116
    %v126 = vmul.f32 %v78, %v116
    %v127 = vmul.f32 %v83, %v116
    %v128 = vmul.f32 %v88, %v116
    %v129 = vmul.f32 %v93, %v116
    %v130 = vmul.f32 %v98, %v116
    %v131 = vmul.f32 %v103, %v116
    %v132 = vmul.f32 %v108, %v116
    %v133 = vmul.f32 %v113, %v116
    %134 = vset.pattern.permute.xlu0 1
    %135 = vperm.xlu0 %134, %v19
    %v136 = vpop.permute.xlu0 %135
    %138 = vset.pattern.permute.xlu0 1
    %139 = vperm.xlu0 %138, %v20
    %v140 = vpop.permute.xlu0 %139
    %142 = vset.pattern.permute.xlu0 1
    %143 = vperm.xlu0 %142, %v21
    %v144 = vpop.permute.xlu0 %143
    %146 = vset.pattern.permute.xlu0 1
    %147 = vperm.xlu0 %146, %v22
    %v148 = vpop.permute.xlu0 %147
    %150 = vset.pattern.permute.xlu0 1
    %151 = vperm.xlu0 %150, %v23
    %v152 = vpop.permute.xlu0 %151
    %154 = vset.pattern.permute.xlu0 1
    %155 = vperm.xlu0 %154, %v24
    %v156 = vpop.permute.xlu0 %155
    %158 = vset.pattern.permute.xlu0 1
    %159 = vperm.xlu0 %158, %v25
    %v160 = vpop.permute.xlu0 %159
    %162 = vset.pattern.permute.xlu0 1
    %163 = vperm.xlu0 %162, %v26
    %v164 = vpop.permute.xlu0 %163
    %166 = vset.pattern.permute.xlu0 1
    %167 = vperm.xlu0 %166, %v27
    %v168 = vpop.permute.xlu0 %167
    %170 = vset.pattern.permute.xlu0 1
    %171 = vperm.xlu0 %170, %v28
    %v172 = vpop.permute.xlu0 %171
    %174 = vset.pattern.permute.xlu0 1
    %175 = vperm.xlu0 %174, %v29
    %v176 = vpop.permute.xlu0 %175
    %178 = vset.pattern.permute.xlu0 1
    %179 = vperm.xlu0 %178, %v30
    %v180 = vpop.permute.xlu0 %179
    %182 = vset.pattern.permute.xlu0 1
    %183 = vperm.xlu0 %182, %v31
    %v184 = vpop.permute.xlu0 %183
    %186 = vset.pattern.permute.xlu0 1
    %187 = vperm.xlu0 %186, %v32
    %v188 = vpop.permute.xlu0 %187
    %190 = vset.pattern.permute.xlu0 1
    %191 = vperm.xlu0 %190, %v33
    %v192 = vpop.permute.xlu0 %191
    %194 = vset.pattern.permute.xlu0 1
    %195 = vperm.xlu0 %194, %v34
    %v196 = vpop.permute.xlu0 %195
    %v198 = vadd.f32 %v118, %v136
    %v199 = vadd.f32 %v119, %v140
    %v200 = vadd.f32 %v120, %v144
    %v201 = vadd.f32 %v121, %v148
    %v202 = vadd.f32 %v122, %v152
    %v203 = vadd.f32 %v123, %v156
    %v204 = vadd.f32 %v124, %v160
    %v205 = vadd.f32 %v125, %v164
    %v206 = vadd.f32 %v126, %v168
    %v207 = vadd.f32 %v127, %v172
    %v208 = vadd.f32 %v128, %v176
    %v209 = vadd.f32 %v129, %v180
    %v210 = vadd.f32 %v130, %v184
    %v211 = vadd.f32 %v131, %v188
    %v212 = vadd.f32 %v132, %v192
    %v213 = vadd.f32 %v133, %v196
    %v214 = vmax.f32 %v198, 0.0
    %v215 = vmax.f32 %v199, 0.0
    %v216 = vmax.f32 %v200, 0.0
    %v217 = vmax.f32 %v201, 0.0
    %v218 = vmax.f32 %v202, 0.0
    %v219 = vmax.f32 %v203, 0.0
    %v220 = vmax.f32 %v204, 0.0
    %v221 = vmax.f32 %v205, 0.0
    %v222 = vmax.f32 %v206, 0.0
    %v223 = vmax.f32 %v207, 0.0
    %v224 = vmax.f32 %v208, 0.0
    %v225 = vmax.f32 %v209, 0.0
    %v226 = vmax.f32 %v210, 0.0
    %v227 = vmax.f32 %v211, 0.0
    %v228 = vmax.f32 %v212, 0.0
    %v229 = vmax.f32 %v213, 0.0
    %v230 = vld [vmem:[%s2] sm:$0xff]
    %v231 = vld [vmem:[%s2 + $0x8] sm:$0xff]
    %v232 = vld [vmem:[%s2 + $0x10] sm:$0xff]
    %v233 = vld [vmem:[%s2 + $0x18] sm:$0xff]
    %v234 = vld [vmem:[%s2 + $0x20] sm:$0xff]
    %v235 = vld [vmem:[%s2 + $0x28] sm:$0xff]
    %v236 = vld [vmem:[%s2 + $0x30] sm:$0xff]
    %v237 = vld [vmem:[%s2 + $0x38] sm:$0xff]
    %v238 = vld [vmem:[%s2 + $0x40] sm:$0xff]
    %v239 = vld [vmem:[%s2 + $0x48] sm:$0xff]
    %v240 = vld [vmem:[%s2 + $0x50] sm:$0xff]
    %v241 = vld [vmem:[%s2 + $0x58] sm:$0xff]
    %v242 = vld [vmem:[%s2 + $0x60] sm:$0xff]
    %v243 = vld [vmem:[%s2 + $0x68] sm:$0xff]
    %v244 = vld [vmem:[%s2 + $0x70] sm:$0xff]
    %v245 = vld [vmem:[%s2 + $0x78] sm:$0xff]
    %246 = vset.pattern.permute.xlu0 2
    %247 = vperm.xlu0 %246, %v19
    %v248 = vpop.permute.xlu0 %247
    %250 = vset.pattern.permute.xlu0 2
    %251 = vperm.xlu0 %250, %v20
    %v252 = vpop.permute.xlu0 %251
    %254 = vset.pattern.permute.xlu0 2
    %255 = vperm.xlu0 %254, %v21
    %v256 = vpop.permute.xlu0 %255
    %258 = vset.pattern.permute.xlu0 2
    %259 = vperm.xlu0 %258, %v22
    %v260 = vpop.permute.xlu0 %259
    %262 = vset.pattern.permute.xlu0 2
    %263 = vperm.xlu0 %262, %v23
    %v264 = vpop.permute.xlu0 %263
    %266 = vset.pattern.permute.xlu0 2
    %267 = vperm.xlu0 %266, %v24
    %v268 = vpop.permute.xlu0 %267
    %270 = vset.pattern.permute.xlu0 2
    %271 = vperm.xlu0 %270, %v25
    %v272 = vpop.permute.xlu0 %271
    %274 = vset.pattern.permute.xlu0 2
    %275 = vperm.xlu0 %274, %v26
    %v276 = vpop.permute.xlu0 %275
    %278 = vset.pattern.permute.xlu0 2
    %279 = vperm.xlu0 %278, %v27
    %v280 = vpop.permute.xlu0 %279
    %282 = vset.pattern.permute.xlu0 2
    %283 = vperm.xlu0 %282, %v28
    %v284 = vpop.permute.xlu0 %283
    %286 = vset.pattern.permute.xlu0 2
    %287 = vperm.xlu0 %286, %v29
    %v288 = vpop.permute.xlu0 %287
    %290 = vset.pattern.permute.xlu0 2
    %291 = vperm.xlu0 %290, %v30
    %v292 = vpop.permute.xlu0 %291
    %294 = vset.pattern.permute.xlu0 2
    %295 = vperm.xlu0 %294, %v31
    %v296 = vpop.permute.xlu0 %295
    %298 = vset.pattern.permute.xlu0 2
    %299 = vperm.xlu0 %298, %v32
    %v300 = vpop.permute.xlu0 %299
    %302 = vset.pattern.permute.xlu0 2
    %303 = vperm.xlu0 %302, %v33
    %v304 = vpop.permute.xlu0 %303
    %306 = vset.pattern.permute.xlu0 2
    %307 = vperm.xlu0 %306, %v34
    %v308 = vpop.permute.xlu0 %307
    %310 = vmatpush.msra.mxu0 %v229
    %311 = vmatpush.msra.mxu0 %v228
    %312 = vmatpush.msra.mxu0 %v227
    %313 = vmatpush.msra.mxu0 %v226
    %314 = vmatpush.msra.mxu0 %v225
    %315 = vmatpush.msra.mxu0 %v224
    %316 = vmatpush.msra.mxu0 %v223
    %317 = vmatpush.msra.mxu0 %v222
    %318 = vmatpush.msra.mxu0 %v221
    %319 = vmatpush.msra.mxu0 %v220
    %320 = vmatpush.msra.mxu0 %v219
    %321 = vmatpush.msra.mxu0 %v218
    %322 = vmatpush.msra.mxu0 %v217
    %323 = vmatpush.msra.mxu0 %v216
    %324 = vmatpush.msra.mxu0 %v215
    %325 = vmatpush.msra.mxu0 %v214
    %326 = vmatmul.f32.gmra.mxu0 %v230
    %v327 = vpop.f32.mrf.mxu0
    %v328 = vadd.f32 %v248, %v327
    %329 = vmatmul.f32.gmra.mxu0 %v231
    %v330 = vpop.f32.mrf.mxu0
    %v331 = vadd.f32 %v252, %v330
    %332 = vmatmul.f32.gmra.mxu0 %v232
    %v333 = vpop.f32.mrf.mxu0
    %v334 = vadd.f32 %v256, %v333
    %335 = vmatmul.f32.gmra.mxu0 %v233
    %v336 = vpop.f32.mrf.mxu0
    %v337 = vadd.f32 %v260, %v336
    %338 = vmatmul.f32.gmra.mxu0 %v234
    %v339 = vpop.f32.mrf.mxu0
    %v340 = vadd.f32 %v264, %v339
    %341 = vmatmul.f32.gmra.mxu0 %v235
    %v342 = vpop.f32.mrf.mxu0
    %v343 = vadd.f32 %v268, %v342
    %344 = vmatmul.f32.gmra.mxu0 %v236
    %v345 = vpop.f32.mrf.mxu0
    %v346 = vadd.f32 %v272, %v345
    %347 = vmatmul.f32.gmra.mxu0 %v237
    %v348 = vpop.f32.mrf.mxu0
    %v349 = vadd.f32 %v276, %v348
    %350 = vmatmul.f32.gmra.mxu0 %v238
    %v351 = vpop.f32.mrf.mxu0
    %v352 = vadd.f32 %v280, %v351
    %353 = vmatmul.f32.gmra.mxu0 %v239
    %v354 = vpop.f32.mrf.mxu0
    %v355 = vadd.f32 %v284, %v354
    %356 = vmatmul.f32.gmra.mxu0 %v240
    %v357 = vpop.f32.mrf.mxu0
    %v358 = vadd.f32 %v288, %v357
    %359 = vmatmul.f32.gmra.mxu0 %v241
    %v360 = vpop.f32.mrf.mxu0
    %v361 = vadd.f32 %v292, %v360
    %362 = vmatmul.f32.gmra.mxu0 %v242
    %v363 = vpop.f32.mrf.mxu0
    %v364 = vadd.f32 %v296, %v363
    %365 = vmatmul.f32.gmra.mxu0 %v243
    %v366 = vpop.f32.mrf.mxu0
    %v367 = vadd.f32 %v300, %v366
    %368 = vmatmul.f32.gmra.mxu0 %v244
    %v369 = vpop.f32.mrf.mxu0
    %v370 = vadd.f32 %v304, %v369
    %371 = vmatmul.f32.gmra.mxu0 %v245
    %v372 = vpop.f32.mrf.mxu0
    %v373 = vadd.f32 %v308, %v372
    %374 = vdwg.mxu0
    %v375 = vmax.f32 %v328, 0.0
    %v376 = vmax.f32 %v331, 0.0
    %v377 = vmax.f32 %v334, 0.0
    %v378 = vmax.f32 %v337, 0.0
    %v379 = vmax.f32 %v340, 0.0
    %v380 = vmax.f32 %v343, 0.0
    %v381 = vmax.f32 %v346, 0.0
    %v382 = vmax.f32 %v349, 0.0
    %v383 = vmax.f32 %v352, 0.0
    %v384 = vmax.f32 %v355, 0.0
    %v385 = vmax.f32 %v358, 0.0
    %v386 = vmax.f32 %v361, 0.0
    %v387 = vmax.f32 %v364, 0.0
    %v388 = vmax.f32 %v367, 0.0
    %v389 = vmax.f32 %v370, 0.0
    %v390 = vmax.f32 %v373, 0.0
    %v391 = vld [vmem:[%s3] sm:$0xff]
    %392 = vset.pattern.permute.xlu0 3
    %393 = vperm.xlu0 %392, %v19
    %v394 = vpop.permute.xlu0 %393
    %396 = vmatpush.msra.mxu0 %v390
    %397 = vmatpush.msra.mxu0 %v389
    %398 = vmatpush.msra.mxu0 %v388
    %399 = vmatpush.msra.mxu0 %v387
    %400 = vmatpush.msra.mxu0 %v386
    %401 = vmatpush.msra.mxu0 %v385
    %402 = vmatpush.msra.mxu0 %v384
    %403 = vmatpush.msra.mxu0 %v383
    %404 = vmatpush.msra.mxu0 %v382
    %405 = vmatpush.msra.mxu0 %v381
    %406 = vmatpush.msra.mxu0 %v380
    %407 = vmatpush.msra.mxu0 %v379
    %408 = vmatpush.msra.mxu0 %v378
    %409 = vmatpush.msra.mxu0 %v377
    %410 = vmatpush.msra.mxu0 %v376
    %411 = vmatpush.msra.mxu0 %v375
    %412 = vmatmul.f32.gmra.mxu0 %v391
    %v413 = vpop.f32.mrf.mxu0
    %v414 = vadd.f32 %v394, %v413
    %415 = vdwg.mxu0
    %416 = vst [vmem:[#allocation2] sm:$0xff] %v414
    // Predicated region
    $region18: #{tpu_custom_call.1} parent=1 // pred_check
      _
    $region19: #{tpu_custom_call.1} parent=1 // pred_check_branch
      %418 = sbr.rel (0) target = $region21
    $region20: #{tpu_custom_call.1} parent=1 // pred_region
      %420 = vsyncadd [#allocation3], 0
      %s422 = sshll.u32 [#allocation2], 4
      %s423 = int_to_ptr.vmem [resolvable:$true] %s422
      %s424 = sshll.u32 %s4, 4
      %s425 = int_to_ptr.hbm [resolvable:$true] %s424
      %427 = dma.vmem_to_hbm [thread:$0]  %s423, 128, %s425, [#allocation3]
    $region21: #{tpu_custom_call.1} parent=1 // pred_fallthru
      _
    // Predicated region
    $region22: #{tpu_custom_call.1} parent=1 // pred_check
      _
    $region23: #{tpu_custom_call.1} parent=1 // pred_check_branch
      %429 = sbr.rel (0) target = $region25
    $region24: #{tpu_custom_call.1} parent=1 // pred_region
      %431 = dma.done [#allocation3], 128
    $region25: #{tpu_custom_call.1} parent=1 // pred_fallthru
      _
    %432 = vsyncpa [#allocation3], 1

</llo_original>
